<compile_context>
chip_gen: v7x
topology: tpu7x:2x2x1
jax: 0.10.0
libtpu: 0.0.40
codegen_flags: <defaults>
</compile_context>

<pallas_src>
import jax
import jax.numpy as jnp
from jax.experimental import pallas as pl
from jax.experimental.pallas import tpu as pltpu

HIDDEN1 = 64
HIDDEN2 = 128
LANE = 128
SUBLANE_BF16 = 16


def _round_up(n, m):
    return ((n + m - 1) // m) * m


def dqn_kernel(x_ref, w1_ref, b1_ref, w2_ref, b2_ref, w3_ref, b3_ref, o_ref):
    # layer1 + relu: x arrives f32 at natural K, cast to bf16 in-kernel, f32 MXU acc.
    h1 = jnp.dot(x_ref[...].astype(jnp.bfloat16), w1_ref[...],
                 preferred_element_type=jnp.float32)
    h1 = jnp.maximum(h1 + b1_ref[...], 0.0)
    # layer2 + relu
    h2 = jnp.dot(h1.astype(jnp.bfloat16), w2_ref[...],
                 preferred_element_type=jnp.float32)
    h2 = jnp.maximum(h2 + b2_ref[...], 0.0)
    # layer3 (no activation), natural output width
    o_ref[...] = jnp.dot(h2.astype(jnp.bfloat16), w3_ref[...],
                         preferred_element_type=jnp.float32) + b3_ref[...]


def prepare_params(params):
    """One-time prep: pad hidden dims to 128 lanes, cast matmul operands to bf16.

    Input / output feature dims stay at natural width (blocks whose last dim equals
    the full array dim are legal), so HBM traffic for x and the output is minimal.
    Zero padding of hidden dims is numerically inert through bias-add / ReLU.
    """
    w1, b1, w2, b2, w3, b3 = (params[k] for k in ("w1", "b1", "w2", "b2", "w3", "b3"))
    input_dim = w1.shape[0]
    output_dim = w3.shape[1]
    h1p = _round_up(HIDDEN1, LANE)   # 64 -> 128
    h2p = _round_up(HIDDEN2, LANE)   # 128 -> 128

    w1p = jnp.zeros((input_dim, h1p), jnp.float32).at[:, :HIDDEN1].set(w1).astype(jnp.bfloat16)
    b1p = jnp.zeros((1, h1p), jnp.float32).at[:, :HIDDEN1].set(b1)
    w2p = jnp.zeros((h1p, h2p), jnp.float32).at[:HIDDEN1, :HIDDEN2].set(w2).astype(jnp.bfloat16)
    b2p = jnp.zeros((1, h2p), jnp.float32).at[:, :HIDDEN2].set(b2)
    w3p = jnp.zeros((h2p, output_dim), jnp.float32).at[:HIDDEN2, :].set(w3).astype(jnp.bfloat16)
    b3p = b3.astype(jnp.float32)
    return {"w1": w1p, "b1": b1p, "w2": w2p, "b2": b2p, "w3": w3p, "b3": b3p}


def dqn_forward(x, prepared, *, tm=1024):
    """x: (B, input_dim) float32. prepared: output of prepare_params."""
    B, input_dim = x.shape
    w1p, b1p, w2p, b2p, w3p, b3p = (prepared[k] for k in ("w1", "b1", "w2", "b2", "w3", "b3"))
    assert w1p.shape[0] == input_dim, "input_dim mismatch with prepared params"
    h1p = w1p.shape[1]
    h2p = w2p.shape[1]
    output_dim = w3p.shape[1]

    # Pad batch only to the bf16 sublane multiple (16). A partial last grid block is fine:
    # rows are independent, OOB reads are junk rows that get masked on write / sliced off.
    B_p = _round_up(B, SUBLANE_BF16)
    xp = x if B_p == B else jnp.pad(x, ((0, B_p - B), (0, 0)))

    tm_eff = min(tm, B_p)
    # v7x has 2 TensorCores per chip: for larger batches keep >= 2 "parallel" grid steps
    # instead of collapsing to grid=(1,). (No effect on small batches / v5e / v6e.)
    if B_p >= 512 and pl.cdiv(B_p, tm_eff) < 2:
        tm_eff = _round_up(pl.cdiv(B_p, 2), SUBLANE_BF16)
    grid = (pl.cdiv(B_p, tm_eff),)

    def batch_map(i):
        return (i, 0)

    def full_map(i):
        return (0, 0)

    # Advisory cost hint from the REAL (unpadded) dims.
    cost = pl.CostEstimate(
        flops=2 * B * (input_dim * HIDDEN1 + HIDDEN1 * HIDDEN2 + HIDDEN2 * output_dim),
        transcendentals=0,
        bytes_accessed=(x.size * 4
                        + w1p.size * 2 + w2p.size * 2 + w3p.size * 2
                        + (b1p.size + b2p.size + b3p.size) * 4
                        + B * output_dim * 4),
    )

    out = pl.pallas_call(
        dqn_kernel,
        out_shape=jax.ShapeDtypeStruct((B_p, output_dim), jnp.float32),
        grid_spec=pl.GridSpec(
            grid=grid,
            in_specs=[
                pl.BlockSpec((tm_eff, input_dim), batch_map),   # x tile, f32, natural K
                pl.BlockSpec((input_dim, h1p), full_map),       # W1 (bf16)
                pl.BlockSpec((1, h1p), full_map),               # b1 (f32)
                pl.BlockSpec((h1p, h2p), full_map),             # W2 (bf16)
                pl.BlockSpec((1, h2p), full_map),               # b2 (f32)
                pl.BlockSpec((h2p, output_dim), full_map),      # W3 (bf16), natural N
                pl.BlockSpec((1, output_dim), full_map),        # b3 (f32)
            ],
            out_specs=pl.BlockSpec((tm_eff, output_dim), batch_map),
        ),
        compiler_params=pltpu.CompilerParams(
            dimension_semantics=("parallel",),
        ),
        cost_estimate=cost,
    )(xp, w1p, b1p, w2p, b2p, w3p, b3p)

    return out if B_p == B else out[:B]


def init_dqn_params(key, input_dim, output_dim):
    """Deterministic init matching nn.Linear shapes (stored transposed: (in, out))."""
    ks = jax.random.split(key, 6)

    def linear(kw, kb, fan_in, fan_out):
        bound = 1.0 / (fan_in ** 0.5)
        w = jax.random.uniform(kw, (fan_in, fan_out), jnp.float32, -bound, bound)
        b = jax.random.uniform(kb, (1, fan_out), jnp.float32, -bound, bound)
        return w, b

    w1, b1 = linear(ks[0], ks[1], input_dim, HIDDEN1)
    w2, b2 = linear(ks[2], ks[3], HIDDEN1, HIDDEN2)
    w3, b3 = linear(ks[4], ks[5], HIDDEN2, output_dim)
    return {"w1": w1, "b1": b1, "w2": w2, "b2": b2, "w3": w3, "b3": b3}


def dqn_reference(x, p):
    # Reference with the same bf16-operand / f32-accumulate numerics as the kernel.
    bf = jnp.bfloat16
    h1 = jnp.maximum(
        jnp.dot(x.astype(bf), p["w1"].astype(bf), preferred_element_type=jnp.float32) + p["b1"], 0.0)
    h2 = jnp.maximum(
        jnp.dot(h1.astype(bf), p["w2"].astype(bf), preferred_element_type=jnp.float32) + p["b2"], 0.0)
    return jnp.dot(h2.astype(bf), p["w3"].astype(bf), preferred_element_type=jnp.float32) + p["b3"]


if __name__ == "__main__":
    input_dim, output_dim = 16, 8
    batch = 16

    key = jax.random.PRNGKey(0)
    k_params, k_x = jax.random.split(key)
    params = init_dqn_params(k_params, input_dim, output_dim)
    prepared = prepare_params(params)          # one-time, outside the forward path
    x = jax.random.normal(k_x, (batch, input_dim), jnp.float32)

    out = dqn_forward(x, prepared)
    out = jax.block_until_ready(out)

    ref = dqn_reference(x, params)
    assert out.shape == (batch, output_dim), f"bad shape {out.shape}"
    assert jnp.allclose(out, ref, atol=2e-2, rtol=2e-2), "mismatch vs JAX reference"

    print("KERNEL_OK")
</pallas_src>

<mosaic_0001>
module attributes {stable_mosaic.version = 11 : i64} {
  func.func @dqn_kernel(%arg0: i32, %arg1: memref<16x16xf32, #tpu.memory_space<vmem>>, %arg2: memref<16x128xbf16, #tpu.memory_space<vmem>>, %arg3: memref<1x128xf32, #tpu.memory_space<vmem>>, %arg4: memref<128x128xbf16, #tpu.memory_space<vmem>>, %arg5: memref<1x128xf32, #tpu.memory_space<vmem>>, %arg6: memref<128x8xbf16, #tpu.memory_space<vmem>>, %arg7: memref<1x8xf32, #tpu.memory_space<vmem>>, %arg8: memref<16x8xf32, #tpu.memory_space<vmem>>) attributes {dimension_semantics = [#tpu.dimension_semantics<parallel>], iteration_bounds = array<i64: 1>, scalar_prefetch = 0 : i64, scratch_operands = 0 : i64, tpu.core_type = #tpu.core_type<tc>, window_params = [{transform_indices = @transform_0, window_bounds = array<i64: 16, 16>}, {pipeline_mode = #tpu.pipeline_mode<synchronous>, transform_indices = @transform_1, window_bounds = array<i64: 16, 128>}, {pipeline_mode = #tpu.pipeline_mode<synchronous>, transform_indices = @transform_2, window_bounds = array<i64: 1, 128>}, {pipeline_mode = #tpu.pipeline_mode<synchronous>, transform_indices = @transform_3, window_bounds = array<i64: 128, 128>}, {pipeline_mode = #tpu.pipeline_mode<synchronous>, transform_indices = @transform_4, window_bounds = array<i64: 1, 128>}, {pipeline_mode = #tpu.pipeline_mode<synchronous>, transform_indices = @transform_5, window_bounds = array<i64: 128, 8>}, {pipeline_mode = #tpu.pipeline_mode<synchronous>, transform_indices = @transform_6, window_bounds = array<i64: 1, 8>}, {transform_indices = @transform_7, window_bounds = array<i64: 16, 8>}]} {
    %c0 = arith.constant 0 : index
    %c0_0 = arith.constant 0 : index
    %0 = vector.load %arg1[%c0, %c0_0] : memref<16x16xf32, #tpu.memory_space<vmem>>, vector<16x16xf32>
    %1 = arith.truncf %0 : vector<16x16xf32> to vector<16x16xbf16>
    %c0_1 = arith.constant 0 : index
    %c0_2 = arith.constant 0 : index
    %2 = vector.load %arg2[%c0_1, %c0_2] : memref<16x128xbf16, #tpu.memory_space<vmem>>, vector<16x128xbf16>
    %cst = arith.constant dense<0.000000e+00> : vector<16x128xf32>
    %3 = tpu.matmul %1, %2, %cst {dimension_numbers = #tpu.dot_dimension_numbers<[1], [0], [0], [1], [0, 0, 1, 1], [], []>} : vector<16x16xbf16>, vector<16x128xbf16>, vector<16x128xf32> -> vector<16x128xf32>
    %c0_3 = arith.constant 0 : index
    %c0_4 = arith.constant 0 : index
    %4 = vector.load %arg3[%c0_3, %c0_4] : memref<1x128xf32, #tpu.memory_space<vmem>>, vector<1x128xf32>
    %5 = vector.broadcast %4 : vector<1x128xf32> to vector<16x128xf32>
    %6 = arith.addf %3, %5 : vector<16x128xf32>
    %cst_5 = arith.constant 0.000000e+00 : f32
    %7 = vector.broadcast %cst_5 : f32 to vector<16x128xf32>
    %8 = arith.maximumf %6, %7 : vector<16x128xf32>
    %9 = arith.truncf %8 : vector<16x128xf32> to vector<16x128xbf16>
    %c0_6 = arith.constant 0 : index
    %c0_7 = arith.constant 0 : index
    %10 = vector.load %arg4[%c0_6, %c0_7] : memref<128x128xbf16, #tpu.memory_space<vmem>>, vector<128x128xbf16>
    %cst_8 = arith.constant dense<0.000000e+00> : vector<16x128xf32>
    %11 = tpu.matmul %9, %10, %cst_8 {dimension_numbers = #tpu.dot_dimension_numbers<[1], [0], [0], [1], [0, 0, 1, 1], [], []>} : vector<16x128xbf16>, vector<128x128xbf16>, vector<16x128xf32> -> vector<16x128xf32>
    %c0_9 = arith.constant 0 : index
    %c0_10 = arith.constant 0 : index
    %12 = vector.load %arg5[%c0_9, %c0_10] : memref<1x128xf32, #tpu.memory_space<vmem>>, vector<1x128xf32>
    %13 = vector.broadcast %12 : vector<1x128xf32> to vector<16x128xf32>
    %14 = arith.addf %11, %13 : vector<16x128xf32>
    %cst_11 = arith.constant 0.000000e+00 : f32
    %15 = vector.broadcast %cst_11 : f32 to vector<16x128xf32>
    %16 = arith.maximumf %14, %15 : vector<16x128xf32>
    %17 = arith.truncf %16 : vector<16x128xf32> to vector<16x128xbf16>
    %c0_12 = arith.constant 0 : index
    %c0_13 = arith.constant 0 : index
    %18 = vector.load %arg6[%c0_12, %c0_13] : memref<128x8xbf16, #tpu.memory_space<vmem>>, vector<128x8xbf16>
    %cst_14 = arith.constant dense<0.000000e+00> : vector<16x8xf32>
    %19 = tpu.matmul %17, %18, %cst_14 {dimension_numbers = #tpu.dot_dimension_numbers<[1], [0], [0], [1], [0, 0, 1, 1], [], []>} : vector<16x128xbf16>, vector<128x8xbf16>, vector<16x8xf32> -> vector<16x8xf32>
    %c0_15 = arith.constant 0 : index
    %c0_16 = arith.constant 0 : index
    %20 = vector.load %arg7[%c0_15, %c0_16] : memref<1x8xf32, #tpu.memory_space<vmem>>, vector<1x8xf32>
    %21 = vector.broadcast %20 : vector<1x8xf32> to vector<16x8xf32>
    %22 = arith.addf %19, %21 : vector<16x8xf32>
    %c0_17 = arith.constant 0 : index
    %c0_18 = arith.constant 0 : index
    %23 = vector.load %arg8[%c0_17, %c0_18] : memref<16x8xf32, #tpu.memory_space<vmem>>, vector<16x8xf32>
    tpu.vector_store %arg8[%c0_17, %c0_18], %22 {strides = array<i32>} : memref<16x8xf32, #tpu.memory_space<vmem>>, vector<16x8xf32>,
    return
  }
  func.func @transform_0(%arg0: i32) -> (i32, i32) {
    %c0_i32 = arith.constant 0 : i32
    %c0_i32_0 = arith.constant 0 : i32
    return %arg0, %c0_i32 : i32, i32
  }
  func.func @transform_1(%arg0: i32) -> (i32, i32) {
    %c0_i32 = arith.constant 0 : i32
    %c0_i32_0 = arith.constant 0 : i32
    %c0_i32_1 = arith.constant 0 : i32
    return %c0_i32, %c0_i32_0 : i32, i32
  }
  func.func @transform_2(%arg0: i32) -> (i32, i32) {
    %c0_i32 = arith.constant 0 : i32
    %c0_i32_0 = arith.constant 0 : i32
    %c0_i32_1 = arith.constant 0 : i32
    return %c0_i32, %c0_i32_0 : i32, i32
  }
  func.func @transform_3(%arg0: i32) -> (i32, i32) {
    %c0_i32 = arith.constant 0 : i32
    %c0_i32_0 = arith.constant 0 : i32
    %c0_i32_1 = arith.constant 0 : i32
    return %c0_i32, %c0_i32_0 : i32, i32
  }
  func.func @transform_4(%arg0: i32) -> (i32, i32) {
    %c0_i32 = arith.constant 0 : i32
    %c0_i32_0 = arith.constant 0 : i32
    %c0_i32_1 = arith.constant 0 : i32
    return %c0_i32, %c0_i32_0 : i32, i32
  }
  func.func @transform_5(%arg0: i32) -> (i32, i32) {
    %c0_i32 = arith.constant 0 : i32
    %c0_i32_0 = arith.constant 0 : i32
    %c0_i32_1 = arith.constant 0 : i32
    return %c0_i32, %c0_i32_0 : i32, i32
  }
  func.func @transform_6(%arg0: i32) -> (i32, i32) {
    %c0_i32 = arith.constant 0 : i32
    %c0_i32_0 = arith.constant 0 : i32
    %c0_i32_1 = arith.constant 0 : i32
    return %c0_i32, %c0_i32_0 : i32, i32
  }
  func.func @transform_7(%arg0: i32) -> (i32, i32) {
    %c0_i32 = arith.constant 0 : i32
    %c0_i32_0 = arith.constant 0 : i32
    return %arg0, %c0_i32 : i32, i32
  }
}

</mosaic_0001>

<llo_original>
// kernel: tpu_custom_call.1
$region0: #{tpu_custom_call.1}
  #allocation0 [shape = 'u32[]', space=smem, size = 0x4, offset = 0x4, fixed_abs, tag = 'smem constant byte address 0x4 - core index']
  #allocation1 [shape = 'u32[144,128]{1,0:T(1,128)}', space=vmem, size = 0x12000, scoped, tag = 'internal scratch']
  %s0 = inlined_call_operand.hbm [shape: f32[16,16], index: 0, kind: input, shape index: {}]
  %s1 = inlined_call_operand.vmem [shape: bf16[16,128], index: 1, kind: input, shape index: {}]
  %s2 = inlined_call_operand.vmem [shape: f32[1,128], index: 2, kind: input, shape index: {}]
  %s3 = inlined_call_operand.vmem [shape: bf16[128,128], index: 3, kind: input, shape index: {}]
  %s4 = inlined_call_operand.vmem [shape: f32[1,128], index: 4, kind: input, shape index: {}]
  %s5 = inlined_call_operand.vmem [shape: bf16[128,8], index: 5, kind: input, shape index: {}]
  %s6 = inlined_call_operand.vmem [shape: f32[1,8], index: 6, kind: input, shape index: {}]
  %s7 = inlined_call_operand.vmem [shape: f32[16,8], index: 7, kind: output, shape index: {}]
  %s8 = sld [smem:[#allocation0]]
  $region42: #{tpu_custom_call.1} parent=0
    _
  %s10 = ssub.s32 1, %s8
  %s11 = scalar_select 0, %s10, %s8
  $region1: #{tpu_custom_call.1} parent=0
    #allocation2 [shape = 'u8[8192]{0}', space=vmem, size = 0x2000, scoped, tag = 'input window, operand 0, single buffered']
    #allocation3 [shape = 's32[1]{0}', space=sflag, size = 0x4, scoped, tag = 'scoped memory for tpu_custom_call.1']
    %12 = vsyncpa [#allocation3], 0
    // Predicated region
    $region2: #{tpu_custom_call.1} parent=1 // pred_check
      _
    $region3: #{tpu_custom_call.1} parent=1 // pred_check_branch
      %14 = sbr.rel (0) target = $region5
    $region4: #{tpu_custom_call.1} parent=1 // pred_region
      %s16 = ssub.s32 256, 256
      %17 = vsyncadd [#allocation3], %s16
      %s18 = sshll.u32 [#allocation2], 4
      %s19 = int_to_ptr.vmem [resolvable:$true] %s18
      %24 = dma.hbm_to_vmem [thread:$0]  %s0, 256, %s19, [#allocation3], 128, 128, 8
    $region5: #{tpu_custom_call.1} parent=1 // pred_fallthru
      _
    // Predicated region
    $region6: #{tpu_custom_call.1} parent=1 // pred_check
      _
    $region7: #{tpu_custom_call.1} parent=1 // pred_check_branch
      %26 = sbr.rel (0) target = $region9
    $region8: #{tpu_custom_call.1} parent=1 // pred_region
      _
    $region9: #{tpu_custom_call.1} parent=1 // pred_fallthru
      _
    // Predicated region
    $region10: #{tpu_custom_call.1} parent=1 // pred_check
      _
    $region11: #{tpu_custom_call.1} parent=1 // pred_check_branch
      %28 = sbr.rel (0) target = $region13
    $region12: #{tpu_custom_call.1} parent=1 // pred_region
      _
    $region13: #{tpu_custom_call.1} parent=1 // pred_fallthru
      _
    // Predicated region
    $region14: #{tpu_custom_call.1} parent=1 // pred_check
      _
    $region15: #{tpu_custom_call.1} parent=1 // pred_check_branch
      %30 = sbr.rel (0) target = $region17
    $region16: #{tpu_custom_call.1} parent=1 // pred_region
      _
    $region17: #{tpu_custom_call.1} parent=1 // pred_fallthru
      _
    // Predicated region
    $region18: #{tpu_custom_call.1} parent=1 // pred_check
      _
    $region19: #{tpu_custom_call.1} parent=1 // pred_check_branch
      %32 = sbr.rel (0) target = $region21
    $region20: #{tpu_custom_call.1} parent=1 // pred_region
      _
    $region21: #{tpu_custom_call.1} parent=1 // pred_fallthru
      _
    // Predicated region
    $region22: #{tpu_custom_call.1} parent=1 // pred_check
      _
    $region23: #{tpu_custom_call.1} parent=1 // pred_check_branch
      %34 = sbr.rel (0) target = $region25
    $region24: #{tpu_custom_call.1} parent=1 // pred_region
      _
    $region25: #{tpu_custom_call.1} parent=1 // pred_fallthru
      _
    // Predicated region
    $region26: #{tpu_custom_call.1} parent=1 // pred_check
      _
    $region27: #{tpu_custom_call.1} parent=1 // pred_check_branch
      %36 = sbr.rel (0) target = $region29
    $region28: #{tpu_custom_call.1} parent=1 // pred_region
      _
    $region29: #{tpu_custom_call.1} parent=1 // pred_fallthru
      _
    // Predicated region
    $region30: #{tpu_custom_call.1} parent=1 // pred_check
      _
    $region31: #{tpu_custom_call.1} parent=1 // pred_check_branch
      %38 = sbr.rel (0) target = $region33
    $region32: #{tpu_custom_call.1} parent=1 // pred_region
      %39 = dma.done [#allocation3], 256
    $region33: #{tpu_custom_call.1} parent=1 // pred_fallthru
      _
    %v41 = vld [vmem:[#allocation2] sm:$0xff]
    %v42 = vld [vmem:[#allocation2 + $0x8] sm:$0xff]
    %v43 = vpack.c.bf16 %v42, %v41
    %v44 = vld [vmem:[%s1] sm:$0xf]
    %v45 = vld [vmem:[%s1 + $0x4] sm:$0xf]
    %v46 = vld [vmem:[%s2] sm:$0x1]
    %v48 = vlaneseq
    %v49 = vshrl.u32 %v48, 7
    %v50 = vsub.s32 0, %v49
    %v51 = vrot.slane %v46, %v50
    %v55 = vunpack.c.l.b16 %v44
    %v56 = vunpack.c.l.b16 %v45
    %v57 = vpack.c.b16 %v56, %v55
    %vm59 = vcmask 130048
    %v61 = vsel %vm59, %v43, 0
    %63 = vmatprep.subr.bf16.mxu0 0
    %64 = vmatpush1.bf16.msra.mxu0 %v57
    %65 = vmatprep.subr.bf16.mxu0 0
    %66 = vmatpush1.bf16.msra.mxu0 0
    %67 = vmatprep.subr.bf16.mxu0 0
    %68 = vmatpush1.bf16.msra.mxu0 0
    %69 = vmatprep.subr.bf16.mxu0 0
    %70 = vmatpush1.bf16.msra.mxu0 0
    %71 = vmatprep.subr.bf16.mxu0 0
    %72 = vmatpush1.bf16.msra.mxu0 0
    %73 = vmatprep.subr.bf16.mxu0 0
    %74 = vmatpush1.bf16.msra.mxu0 0
    %75 = vmatprep.subr.bf16.mxu0 0
    %76 = vmatpush1.bf16.msra.mxu0 0
    %77 = vmatprep.subr.bf16.mxu0 0
    %78 = vmatpush1.bf16.msra.mxu0 0
    %79 = vmatprep.subr.bf16.mxu0 0
    %80 = vmatpush1.bf16.msra.mxu0 0
    %81 = vmatprep.subr.bf16.mxu0 0
    %82 = vmatpush1.bf16.msra.mxu0 0
    %83 = vmatprep.subr.bf16.mxu0 0
    %84 = vmatpush1.bf16.msra.mxu0 0
    %85 = vmatprep.subr.bf16.mxu0 0
    %86 = vmatpush1.bf16.msra.mxu0 0
    %87 = vmatprep.subr.bf16.mxu0 0
    %88 = vmatpush1.bf16.msra.mxu0 0
    %89 = vmatprep.subr.bf16.mxu0 0
    %90 = vmatpush1.bf16.msra.mxu0 0
    %91 = vmatprep.subr.bf16.mxu0 0
    %92 = vmatpush1.bf16.msra.mxu0 0
    %93 = vmatprep.subr.bf16.mxu0 0
    %94 = vmatpush1.bf16.msra.mxu0 0
    %95 = vmatprep.mubr.bf16.mxu0 0
    %96 = vmatmul.mubr.bf16.gmra.mrb[0].mxu0 %v61
    %v97 = vpop.f32.mrb[0].mxu0
    %v98 = vadd.f32 %v51, %v97
    %v99 = vpop.f32.mrb[0].mxu0
    %v100 = vpop.f32.mrb[0].mxu0
    %v101 = vadd.f32 %v51, %v100
    %v102 = vpop.f32.mrb[0].mxu0
    %103 = vdwg.mxu0
    %v104 = vmax.f32 %v98, 0.0
    %v105 = vmax.f32 %v101, 0.0
    %v106 = vpack.c.bf16 %v105, %v104
    %v107 = vld [vmem:[%s3] sm:$0xf]
    %v108 = vld [vmem:[%s3 + $0x4] sm:$0xf]
    %v109 = vld [vmem:[%s3 + $0x8] sm:$0xf]
    %v110 = vld [vmem:[%s3 + $0xc] sm:$0xf]
    %v111 = vld [vmem:[%s3 + $0x10] sm:$0xf]
    %v112 = vld [vmem:[%s3 + $0x14] sm:$0xf]
    %v113 = vld [vmem:[%s3 + $0x18] sm:$0xf]
    %v114 = vld [vmem:[%s3 + $0x1c] sm:$0xf]
    %v115 = vld [vmem:[%s3 + $0x20] sm:$0xf]
    %v116 = vld [vmem:[%s3 + $0x24] sm:$0xf]
    %v117 = vld [vmem:[%s3 + $0x28] sm:$0xf]
    %v118 = vld [vmem:[%s3 + $0x2c] sm:$0xf]
    %v119 = vld [vmem:[%s3 + $0x30] sm:$0xf]
    %v120 = vld [vmem:[%s3 + $0x34] sm:$0xf]
    %v121 = vld [vmem:[%s3 + $0x38] sm:$0xf]
    %v122 = vld [vmem:[%s3 + $0x3c] sm:$0xf]
    %v123 = vld [vmem:[%s4] sm:$0x1]
    %v125 = vlaneseq
    %v126 = vshrl.u32 %v125, 7
    %v127 = vsub.s32 0, %v126
    %v128 = vrot.slane %v123, %v127
    %v146 = vunpack.c.l.b16 %v107
    %v147 = vunpack.c.l.b16 %v108
    %v148 = vunpack.c.l.b16 %v109
    %v149 = vunpack.c.l.b16 %v110
    %v150 = vunpack.c.l.b16 %v111
    %v151 = vunpack.c.l.b16 %v112
    %v152 = vunpack.c.l.b16 %v113
    %v153 = vunpack.c.l.b16 %v114
    %v154 = vunpack.c.l.b16 %v115
    %v155 = vunpack.c.l.b16 %v116
    %v156 = vunpack.c.l.b16 %v117
    %v157 = vunpack.c.l.b16 %v118
    %v158 = vunpack.c.l.b16 %v119
    %v159 = vunpack.c.l.b16 %v120
    %v160 = vunpack.c.l.b16 %v121
    %v161 = vunpack.c.l.b16 %v122
    %v162 = vpack.c.b16 %v147, %v146
    %v163 = vpack.c.b16 %v149, %v148
    %v164 = vpack.c.b16 %v151, %v150
    %v165 = vpack.c.b16 %v153, %v152
    %v166 = vpack.c.b16 %v155, %v154
    %v167 = vpack.c.b16 %v157, %v156
    %v168 = vpack.c.b16 %v159, %v158
    %v169 = vpack.c.b16 %v161, %v160
    %178 = vmatprep.subr.bf16.mxu0 0
    %179 = vmatpush1.bf16.msra.mxu0 %v162
    %180 = vmatprep.subr.bf16.mxu0 0
    %181 = vmatpush1.bf16.msra.mxu0 %v163
    %182 = vmatprep.subr.bf16.mxu0 0
    %183 = vmatpush1.bf16.msra.mxu0 %v164
    %184 = vmatprep.subr.bf16.mxu0 0
    %185 = vmatpush1.bf16.msra.mxu0 %v165
    %186 = vmatprep.subr.bf16.mxu0 0
    %187 = vmatpush1.bf16.msra.mxu0 %v166
    %188 = vmatprep.subr.bf16.mxu0 0
    %189 = vmatpush1.bf16.msra.mxu0 %v167
    %190 = vmatprep.subr.bf16.mxu0 0
    %191 = vmatpush1.bf16.msra.mxu0 %v168
    %192 = vmatprep.subr.bf16.mxu0 0
    %193 = vmatpush1.bf16.msra.mxu0 %v169
    %194 = vmatprep.subr.bf16.mxu0 0
    %195 = vmatpush1.bf16.msra.mxu0 0
    %196 = vmatprep.subr.bf16.mxu0 0
    %197 = vmatpush1.bf16.msra.mxu0 0
    %198 = vmatprep.subr.bf16.mxu0 0
    %199 = vmatpush1.bf16.msra.mxu0 0
    %200 = vmatprep.subr.bf16.mxu0 0
    %201 = vmatpush1.bf16.msra.mxu0 0
    %202 = vmatprep.subr.bf16.mxu0 0
    %203 = vmatpush1.bf16.msra.mxu0 0
    %204 = vmatprep.subr.bf16.mxu0 0
    %205 = vmatpush1.bf16.msra.mxu0 0
    %206 = vmatprep.subr.bf16.mxu0 0
    %207 = vmatpush1.bf16.msra.mxu0 0
    %208 = vmatprep.subr.bf16.mxu0 0
    %209 = vmatpush1.bf16.msra.mxu0 0
    %210 = vmatprep.mubr.bf16.mxu0 0
    %211 = vmatmul.mubr.bf16.gmra.mrb[0].mxu0 %v106
    %v212 = vpop.f32.mrb[0].mxu0
    %v213 = vadd.f32 %v128, %v212
    %v214 = vpop.f32.mrb[0].mxu0
    %v215 = vpop.f32.mrb[0].mxu0
    %v216 = vadd.f32 %v128, %v215
    %v217 = vpop.f32.mrb[0].mxu0
    %218 = vdwg.mxu0
    %v219 = vmax.f32 %v213, 0.0
    %v220 = vmax.f32 %v216, 0.0
    %v221 = vpack.c.bf16 %v220, %v219
    %v222 = vld [vmem:[%s5] sm:$0xf]
    %v223 = vld [vmem:[%s5 + $0x4] sm:$0xf]
    %v224 = vld [vmem:[%s5 + $0x8] sm:$0xf]
    %v225 = vld [vmem:[%s5 + $0xc] sm:$0xf]
    %v226 = vld [vmem:[%s5 + $0x10] sm:$0xf]
    %v227 = vld [vmem:[%s5 + $0x14] sm:$0xf]
    %v228 = vld [vmem:[%s5 + $0x18] sm:$0xf]
    %v229 = vld [vmem:[%s5 + $0x1c] sm:$0xf]
    %v230 = vld [vmem:[%s5 + $0x20] sm:$0xf]
    %v231 = vld [vmem:[%s5 + $0x24] sm:$0xf]
    %v232 = vld [vmem:[%s5 + $0x28] sm:$0xf]
    %v233 = vld [vmem:[%s5 + $0x2c] sm:$0xf]
    %v234 = vld [vmem:[%s5 + $0x30] sm:$0xf]
    %v235 = vld [vmem:[%s5 + $0x34] sm:$0xf]
    %v236 = vld [vmem:[%s5 + $0x38] sm:$0xf]
    %v237 = vld [vmem:[%s5 + $0x3c] sm:$0xf]
    %v238 = vld [vmem:[%s6] sm:$0x1]
    %v240 = vlaneseq
    %v241 = vshrl.u32 %v240, 7
    %v242 = vsub.s32 0, %v241
    %v243 = vrot.slane %v238, %v242
    %v261 = vunpack.c.l.b16 %v222
    %v262 = vunpack.c.l.b16 %v223
    %v263 = vunpack.c.l.b16 %v224
    %v264 = vunpack.c.l.b16 %v225
    %v265 = vunpack.c.l.b16 %v226
    %v266 = vunpack.c.l.b16 %v227
    %v267 = vunpack.c.l.b16 %v228
    %v268 = vunpack.c.l.b16 %v229
    %v269 = vunpack.c.l.b16 %v230
    %v270 = vunpack.c.l.b16 %v231
    %v271 = vunpack.c.l.b16 %v232
    %v272 = vunpack.c.l.b16 %v233
    %v273 = vunpack.c.l.b16 %v234
    %v274 = vunpack.c.l.b16 %v235
    %v275 = vunpack.c.l.b16 %v236
    %v276 = vunpack.c.l.b16 %v237
    %v277 = vpack.c.b16 %v262, %v261
    %v278 = vpack.c.b16 %v264, %v263
    %v279 = vpack.c.b16 %v266, %v265
    %v280 = vpack.c.b16 %v268, %v267
    %v281 = vpack.c.b16 %v270, %v269
    %v282 = vpack.c.b16 %v272, %v271
    %v283 = vpack.c.b16 %v274, %v273
    %v284 = vpack.c.b16 %v276, %v275
    %293 = vmatprep.subr.bf16.mxu0 0
    %294 = vmatpush1.bf16.msra.mxu0 %v277
    %295 = vmatprep.subr.bf16.mxu0 0
    %296 = vmatpush1.bf16.msra.mxu0 %v278
    %297 = vmatprep.subr.bf16.mxu0 0
    %298 = vmatpush1.bf16.msra.mxu0 %v279
    %299 = vmatprep.subr.bf16.mxu0 0
    %300 = vmatpush1.bf16.msra.mxu0 %v280
    %301 = vmatprep.subr.bf16.mxu0 0
    %302 = vmatpush1.bf16.msra.mxu0 %v281
    %303 = vmatprep.subr.bf16.mxu0 0
    %304 = vmatpush1.bf16.msra.mxu0 %v282
    %305 = vmatprep.subr.bf16.mxu0 0
    %306 = vmatpush1.bf16.msra.mxu0 %v283
    %307 = vmatprep.subr.bf16.mxu0 0
    %308 = vmatpush1.bf16.msra.mxu0 %v284
    %309 = vmatprep.subr.bf16.mxu0 0
    %310 = vmatpush1.bf16.msra.mxu0 0
    %311 = vmatprep.subr.bf16.mxu0 0
    %312 = vmatpush1.bf16.msra.mxu0 0
    %313 = vmatprep.subr.bf16.mxu0 0
    %314 = vmatpush1.bf16.msra.mxu0 0
    %315 = vmatprep.subr.bf16.mxu0 0
    %316 = vmatpush1.bf16.msra.mxu0 0
    %317 = vmatprep.subr.bf16.mxu0 0
    %318 = vmatpush1.bf16.msra.mxu0 0
    %319 = vmatprep.subr.bf16.mxu0 0
    %320 = vmatpush1.bf16.msra.mxu0 0
    %321 = vmatprep.subr.bf16.mxu0 0
    %322 = vmatpush1.bf16.msra.mxu0 0
    %323 = vmatprep.subr.bf16.mxu0 0
    %324 = vmatpush1.bf16.msra.mxu0 0
    %325 = vmatprep.mubr.bf16.mxu0 0
    %326 = vmatmul.mubr.bf16.gmra.mrb[0].mxu0 %v221
    %v327 = vpop.f32.mrb[0].mxu0
    %v328 = vadd.f32 %v243, %v327
    %v329 = vpop.f32.mrb[0].mxu0
    %v330 = vpop.f32.mrb[0].mxu0
    %v331 = vadd.f32 %v243, %v330
    %v332 = vpop.f32.mrb[0].mxu0
    %333 = vdwg.mxu0
    %vm334 = vcmask 64512
    %335 = vst.msk [vmem:[%s7] sm:$0xff] %vm334, %v328
    %336 = vst.msk [vmem:[%s7 + $0x8] sm:$0xff] %vm334, %v331
    // Predicated region
    $region34: #{tpu_custom_call.1} parent=1 // pred_check
      _
    $region35: #{tpu_custom_call.1} parent=1 // pred_check_branch
      %338 = sbr.rel (0) target = $region37
    $region36: #{tpu_custom_call.1} parent=1 // pred_region
      _
    $region37: #{tpu_custom_call.1} parent=1 // pred_fallthru
      _
    // Predicated region
    $region38: #{tpu_custom_call.1} parent=1 // pred_check
      _
    $region39: #{tpu_custom_call.1} parent=1 // pred_check_branch
      %340 = sbr.rel (0) target = $region41
    $region40: #{tpu_custom_call.1} parent=1 // pred_region
      _
    $region41: #{tpu_custom_call.1} parent=1 // pred_fallthru
      _
    %341 = vsyncpa [#allocation3], 1

</llo_original>
